<compile_context>
chip_gen: v7x
topology: tpu7x:2x2x1
jax: 0.10.0
libtpu: 0.0.40
codegen_flags: <defaults>
</compile_context>

<pallas_src>
import functools

import jax
import jax.numpy as jnp
from jax.experimental import pallas as pl
from jax.experimental.pallas import tpu as pltpu


def _center_loss_kernel(x_ref, c_ref, out_ref, acc_ref, *, batch_size, tile_b):
    """One batch tile: row-wise clamped squared distance, accumulated in SMEM.

    x_ref, c_ref : (tile_b, D) f32 VMEM tiles (features / gathered own-class centers)
    out_ref      : (1, 1) f32 SMEM output (the final mean)
    acc_ref      : (1, 1) f32 SMEM running-sum scratch (persists across grid steps)
    """
    i = pl.program_id(0)

    @pl.when(i == 0)
    def _():
        acc_ref[0, 0] = jnp.float32(0.0)

    diff = x_ref[...] - c_ref[...]                              # (TB, D) f32, VPU
    per_row = jnp.sum(diff * diff, axis=1, keepdims=True)       # (TB, 1)
    # Clamp per-sample distance exactly as torch .clamp(min=1e-12, max=1e12).
    per_row = jnp.clip(per_row, 1e-12, 1e12)

    # Mask padded rows in the final tile (B need not be a multiple of tile_b).
    row = i * tile_b + jax.lax.broadcasted_iota(jnp.int32, (tile_b, 1), 0)
    per_row = jnp.where(row < batch_size, per_row, 0.0)

    acc_ref[0, 0] += jnp.sum(per_row)

    @pl.when(i == pl.num_programs(0) - 1)
    def _():
        out_ref[0, 0] = acc_ref[0, 0] / jnp.float32(batch_size)


def center_loss(x, centers, labels, *, tile_b=512):
    """x: (B, D) f32, centers: (C, D) f32, labels: (B,) int -> scalar f32."""
    B, D = x.shape
    x = x.astype(jnp.float32)

    # Gather each sample's own class center in the wrapper (XLA gather). This
    # removes the (B, C) distmat, the iota/mask, and the lane-sparse labels
    # block from the kernel entirely.
    selected = jnp.take(centers.astype(jnp.float32),
                        labels.astype(jnp.int32), axis=0)       # (B, D)

    # Batch tile: multiple of 8 (sublane), capped so a double-buffered
    # (x-tile + centers-tile) footprint stays far below v7x's 64 MiB VMEM.
    b_pad8 = ((B + 7) // 8) * 8
    tb = min(tile_b, b_pad8)
    tb = ((tb + 7) // 8) * 8

    # Pad the batch axis up to a multiple of the tile; padded rows are masked
    # inside the kernel before accumulation so the mean stays exact.
    num_tiles = (B + tb - 1) // tb
    b_padded = num_tiles * tb
    if b_padded != B:
        pad = b_padded - B
        x = jnp.pad(x, ((0, pad), (0, 0)))
        selected = jnp.pad(selected, ((0, pad), (0, 0)))

    kernel = functools.partial(_center_loss_kernel, batch_size=B, tile_b=tb)

    out = pl.pallas_call(
        kernel,
        out_shape=jax.ShapeDtypeStruct((1, 1), jnp.float32),
        grid_spec=pltpu.PrefetchScalarGridSpec(
            num_scalar_prefetch=0,
            grid=(num_tiles,),
            in_specs=[
                pl.BlockSpec((tb, D), lambda i: (i, 0)),
                pl.BlockSpec((tb, D), lambda i: (i, 0)),
            ],
            # Scalar reduction output lives in SMEM (single sst, no padded
            # (8,128) VMEM tile / masked lane-sparse stores).
            out_specs=pl.BlockSpec(memory_space=pltpu.MemorySpace.SMEM),
            scratch_shapes=[pltpu.SMEM((1, 1), jnp.float32)],
        ),
        # Serial accumulation across batch tiles -> the axis must be
        # "arbitrary". (On v7x, a parallel split would need per-tile partial
        # outputs combined in the wrapper; not worth it at these sizes.)
        compiler_params=pltpu.CompilerParams(
            dimension_semantics=("arbitrary",),
        ),
    )(x, selected)
    return out[0, 0]


def center_loss_ref(x, centers, labels):
    """Pure-JAX reference mirroring the PyTorch forward (distmat formulation)."""
    B = x.shape[0]
    C = centers.shape[0]
    distmat = (
        jnp.sum(x**2, axis=1, keepdims=True)
        + jnp.sum(centers**2, axis=1)[None, :]
        - 2.0 * x @ centers.T
    )
    classes = jnp.arange(C, dtype=jnp.int32)
    mask = labels[:, None].astype(jnp.int32) == classes[None, :]
    clamped = jnp.clip(distmat, 1e-12, 1e12)
    return jnp.sum(jnp.where(mask, clamped, 0.0)) / B


if __name__ == "__main__":
    # Module defaults: num_classes=10, feat_dim=2 -> small but representative
    # shapes: batch=8, feat_dim=32, num_classes=10.
    # TODO(synk): for truly tiny feat_dim (e.g. the default D=2), repacking the
    # feature axis lane-dense would cut wasted VPU/DMA lanes further.
    B, D, C = 8, 32, 10

    key = jax.random.PRNGKey(0)
    kx, kc, kl = jax.random.split(key, 3)
    x = jax.random.normal(kx, (B, D), dtype=jnp.float32)
    centers = jax.random.normal(kc, (C, D), dtype=jnp.float32)  # stands in for torch.randn parameter
    labels = jax.random.randint(kl, (B,), 0, C, dtype=jnp.int32)

    loss = center_loss(x, centers, labels)
    jax.block_until_ready(loss)

    ref = center_loss_ref(x, centers, labels)
    assert jnp.allclose(loss, ref, rtol=1e-5, atol=1e-5), (loss, ref)

    print("KERNEL_OK")
</pallas_src>

<mosaic_0001>
module attributes {stable_mosaic.version = 11 : i64} {
  func.func @_center_loss_kernel(%arg0: i32, %arg1: memref<8x32xf32, #tpu.memory_space<vmem>>, %arg2: memref<8x32xf32, #tpu.memory_space<vmem>>, %arg3: memref<1x1xf32, #tpu.memory_space<smem>>, %arg4: memref<1x1xf32, #tpu.memory_space<smem>>) attributes {dimension_semantics = [#tpu.dimension_semantics<arbitrary>], iteration_bounds = array<i64: 1>, scalar_prefetch = 0 : i64, scratch_operands = 1 : i64, tpu.core_type = #tpu.core_type<tc>, window_params = [{transform_indices = @transform_0, window_bounds = array<i64: 8, 32>}, {transform_indices = @transform_1, window_bounds = array<i64: 8, 32>}, {transform_indices = @transform_2, window_bounds = array<i64: 1, 1>}]} {
    %c0_i32 = arith.constant 0 : i32
    %0 = arith.cmpi eq, %arg0, %c0_i32 : i32
    %1 = arith.extui %0 : i1 to i32
    %c0_i32_0 = arith.constant 0 : i32
    %2 = arith.cmpi ne, %1, %c0_i32_0 : i32
    scf.if %2 {
      %cst_15 = arith.constant 0.000000e+00 : f32
      %c0_16 = arith.constant 0 : index
      %c0_17 = arith.constant 0 : index
      %31 = memref.load %arg4[%c0_16, %c0_17] : memref<1x1xf32, #tpu.memory_space<smem>>
      memref.store %cst_15, %arg4[%c0_16, %c0_17] : memref<1x1xf32, #tpu.memory_space<smem>>
    } else {
    }
    %c0 = arith.constant 0 : index
    %c0_1 = arith.constant 0 : index
    %3 = vector.load %arg1[%c0, %c0_1] : memref<8x32xf32, #tpu.memory_space<vmem>>, vector<8x32xf32>
    %c0_2 = arith.constant 0 : index
    %c0_3 = arith.constant 0 : index
    %4 = vector.load %arg2[%c0_2, %c0_3] : memref<8x32xf32, #tpu.memory_space<vmem>>, vector<8x32xf32>
    %5 = arith.subf %3, %4 : vector<8x32xf32>
    %6 = arith.mulf %5, %5 : vector<8x32xf32>
    %cst = arith.constant dense<0.000000e+00> : vector<8xf32>
    %7 = vector.multi_reduction <add>, %6, %cst [1] : vector<8x32xf32> to vector<8xf32>
    %8 = vector.shape_cast %7 : vector<8xf32> to vector<8x1xf32>
    %cst_4 = arith.constant 9.99999996E-13 : f32
    %cst_5 = arith.constant 9.99999995E+11 : f32
    %9 = vector.broadcast %cst_4 : f32 to vector<8x1xf32>
    %10 = arith.maximumf %9, %8 : vector<8x1xf32>
    %11 = vector.broadcast %cst_5 : f32 to vector<8x1xf32>
    %12 = arith.minimumf %11, %10 : vector<8x1xf32>
    %c8_i32 = arith.constant 8 : i32
    %13 = arith.muli %arg0, %c8_i32 : i32
    %14 = tpu.iota {dimensions = array<i32: 0>} : vector<8x1xi32>
    %15 = vector.broadcast %13 : i32 to vector<8x1xi32>
    %16 = arith.addi %15, %14 : vector<8x1xi32>
    %c8_i32_6 = arith.constant 8 : i32
    %17 = vector.broadcast %c8_i32_6 : i32 to vector<8x1xi32>
    %18 = arith.cmpi slt, %16, %17 : vector<8x1xi32>
    %cst_7 = arith.constant 0.000000e+00 : f32
    %19 = vector.broadcast %cst_7 : f32 to vector<8x1xf32>
    %20 = arith.select %18, %12, %19 : vector<8x1xi1>, vector<8x1xf32>
    %c0_8 = arith.constant 0 : index
    %c0_9 = arith.constant 0 : index
    %21 = memref.load %arg4[%c0_8, %c0_9] : memref<1x1xf32, #tpu.memory_space<smem>>
    %22 = vector.shape_cast %20 : vector<8x1xf32> to vector<1x8x1xf32>
    %cst_10 = arith.constant dense<0.000000e+00> : vector<1xf32>
    %23 = vector.multi_reduction <add>, %22, %cst_10 [1, 2] : vector<1x8x1xf32> to vector<1xf32>
    %24 = vector.shape_cast %23 : vector<1xf32> to vector<1x1x1xf32>
    %25 = vector.extract %24[0, 0, 0] : f32 from vector<1x1x1xf32>
    %26 = arith.addf %21, %25 : f32
    %c0_11 = arith.constant 0 : index
    %c0_12 = arith.constant 0 : index
    %27 = memref.load %arg4[%c0_11, %c0_12] : memref<1x1xf32, #tpu.memory_space<smem>>
    memref.store %26, %arg4[%c0_11, %c0_12] : memref<1x1xf32, #tpu.memory_space<smem>>
    %c0_i32_13 = arith.constant 0 : i32
    %28 = arith.cmpi eq, %arg0, %c0_i32_13 : i32
    %29 = arith.extui %28 : i1 to i32
    %c0_i32_14 = arith.constant 0 : i32
    %30 = arith.cmpi ne, %29, %c0_i32_14 : i32
    scf.if %30 {
      %c0_15 = arith.constant 0 : index
      %c0_16 = arith.constant 0 : index
      %31 = memref.load %arg4[%c0_15, %c0_16] : memref<1x1xf32, #tpu.memory_space<smem>>
      %cst_17 = arith.constant 8.000000e+00 : f32
      %32 = arith.divf %31, %cst_17 : f32
      %c0_18 = arith.constant 0 : index
      %c0_19 = arith.constant 0 : index
      %33 = memref.load %arg3[%c0_18, %c0_19] : memref<1x1xf32, #tpu.memory_space<smem>>
      memref.store %32, %arg3[%c0_18, %c0_19] : memref<1x1xf32, #tpu.memory_space<smem>>
    } else {
    }
    return
  }
  func.func @transform_0(%arg0: i32) -> (i32, i32) {
    %c0_i32 = arith.constant 0 : i32
    %c0_i32_0 = arith.constant 0 : i32
    return %arg0, %c0_i32 : i32, i32
  }
  func.func @transform_1(%arg0: i32) -> (i32, i32) {
    %c0_i32 = arith.constant 0 : i32
    %c0_i32_0 = arith.constant 0 : i32
    return %arg0, %c0_i32 : i32, i32
  }
  func.func @transform_2(%arg0: i32) -> (i32, i32) {
    %c0_i32 = arith.constant 0 : i32
    %c0_i32_0 = arith.constant 0 : i32
    %c0_i32_1 = arith.constant 0 : i32
    return %c0_i32, %c0_i32_0 : i32, i32
  }
}

</mosaic_0001>

<llo_original>
// kernel: tpu_custom_call.1
$region0: #{tpu_custom_call.1}
  #allocation0 [shape = 'u32[]', space=smem, size = 0x4, offset = 0x4, fixed_abs, tag = 'smem constant byte address 0x4 - core index']
  #allocation1 [shape = 'u32[144,128]{1,0:T(1,128)}', space=vmem, size = 0x12000, scoped, tag = 'internal scratch']
  #allocation2 [shape = 'f32[1,1]{1,0:T(1,128)}', space=smem, size = 0x200, scoped, tag = 'scratch operand']
  %s0 = inlined_call_operand.hbm [shape: f32[8,32], index: 0, kind: input, shape index: {}]
  %s1 = inlined_call_operand.hbm [shape: f32[8,32], index: 1, kind: input, shape index: {}]
  %s2 = inlined_call_operand.hbm [shape: f32[1,1], index: 2, kind: output, shape index: {}]
  %s3 = sld [smem:[#allocation0]]
  $region34: #{tpu_custom_call.1} parent=0
    _
  %s5 = ssub.s32 1, %s3
  %s6 = scalar_select 0, %s5, %s3
  $region1: #{tpu_custom_call.1} parent=0
    #allocation3 [shape = 'u8[4096]{0}', space=vmem, size = 0x1000, scoped, tag = 'input window, operand 0, single buffered']
    #allocation4 [shape = 's32[1]{0}', space=sflag, size = 0x4, scoped, tag = 'scoped memory for tpu_custom_call.1']
    #allocation5 [shape = 's32[1]{0}', space=sflag, size = 0x4, scoped, tag = 'scoped memory for tpu_custom_call.1']
    #allocation6 [shape = 'u8[4096]{0}', space=vmem, size = 0x1000, scoped, tag = 'input window, operand 1, single buffered']
    #allocation7 [shape = 's32[1]{0}', space=sflag, size = 0x4, scoped, tag = 'scoped memory for tpu_custom_call.1']
    #allocation8 [shape = 'u8[512]{0}', space=smem, size = 0x200, scoped, tag = 'output window, operand 0, single buffered']
    %7 = vsyncpa [#allocation4], 0
    %8 = vsyncpa [#allocation7], 0
    %9 = vsyncpa [#allocation5], 0
    // Predicated region
    $region2: #{tpu_custom_call.1} parent=1 // pred_check
      _
    $region3: #{tpu_custom_call.1} parent=1 // pred_check_branch
      %11 = sbr.rel (0) target = $region5
    $region4: #{tpu_custom_call.1} parent=1 // pred_region
      %s13 = ssub.s32 128, 128
      %14 = vsyncadd [#allocation4], %s13
      %s16 = sshll.u32 [#allocation3], 4
      %s17 = int_to_ptr.vmem [resolvable:$true] %s16
      %19 = dma.hbm_to_vmem [thread:$0]  %s0, 128, %s17, [#allocation4]
    $region5: #{tpu_custom_call.1} parent=1 // pred_fallthru
      _
    // Predicated region
    $region6: #{tpu_custom_call.1} parent=1 // pred_check
      _
    $region7: #{tpu_custom_call.1} parent=1 // pred_check_branch
      %21 = sbr.rel (0) target = $region9
    $region8: #{tpu_custom_call.1} parent=1 // pred_region
      %s23 = ssub.s32 128, 128
      %24 = vsyncadd [#allocation7], %s23
      %s26 = sshll.u32 [#allocation6], 4
      %s27 = int_to_ptr.vmem [resolvable:$true] %s26
      %29 = dma.hbm_to_vmem [thread:$0]  %s1, 128, %s27, [#allocation7]
    $region9: #{tpu_custom_call.1} parent=1 // pred_fallthru
      _
    // Predicated region
    $region10: #{tpu_custom_call.1} parent=1 // pred_check
      _
    $region11: #{tpu_custom_call.1} parent=1 // pred_check_branch
      %31 = sbr.rel (0) target = $region13
    $region12: #{tpu_custom_call.1} parent=1 // pred_region
      %32 = dma.done [#allocation4], 128
    $region13: #{tpu_custom_call.1} parent=1 // pred_fallthru
      _
    // Predicated region
    $region14: #{tpu_custom_call.1} parent=1 // pred_check
      _
    $region15: #{tpu_custom_call.1} parent=1 // pred_check_branch
      %34 = sbr.rel (0) target = $region17
    $region16: #{tpu_custom_call.1} parent=1 // pred_region
      %35 = dma.done [#allocation7], 128
    $region17: #{tpu_custom_call.1} parent=1 // pred_fallthru
      _
    %p36 = scmp.eq.s32.totalorder 0, 0
    // Predicated region
    $region18: #{tpu_custom_call.1} parent=1 // pred_check
      %p37 = pneg %p36
    $region19: #{tpu_custom_call.1} parent=1 // pred_check_branch
      %39 = sbr.rel (%p37) target = $region21
    $region20: #{tpu_custom_call.1} parent=1 // pred_region
      %s40 = scalar_lea.smem [#allocation2], 0
      %41 = sst [smem:[%s40]] 0.0
    $region21: #{tpu_custom_call.1} parent=1 // pred_fallthru
      _
    %v42 = vld [vmem:[#allocation3] sm:$0xff]
    %v43 = vld [vmem:[#allocation6] sm:$0xff]
    %v44 = vsub.f32 %v42, %v43
    %v45 = vmul.f32 %v44, %v44
    %vm46 = vcmask 261120
    %v47 = vsel %vm46, %v45, 0.0
    %48 = vadd.xlane.f32.xlu0 %v47
    %v49 = vpop.xlane.xlu0 %48
    %v50 = vmax.f32 %v49, 1e-12
    %v51 = vmin.f32 %v50, 1e+12
    %s52 = smul.u32 0, 8
    %v53 = vlaneseq
    %v54 = vshrl.u32 %v53, 7
    %v55 = vstv %s52
    %v56 = vadd.s32 %v55, %v54
    %vm57 = vcmp.lt.s32.totalorder %v56, 8
    %v58 = vsel %vm57, %v51, 0.0
    %s59 = sld [smem:[#allocation2]]
    %vm60 = vcmask 7168
    %v61 = vsel %vm60, %v58, 0.0
    %62 = vadd.xlane.f32.xlu0 %v61
    %v63 = vpop.xlane.xlu0 %62
    %v64 = vrot.slane %v63, 4
    %v65 = vadd.f32 %v63, %v64
    %v66 = vrot.slane %v65, 2
    %v67 = vadd.f32 %v65, %v66
    %v68 = vrot.slane %v67, 1
    %v69 = vadd.f32 %v67, %v68
    %s70 = vtos %v69
    %s71 = sadd.f32 %s59, %s70
    %s72 = scalar_lea.smem [#allocation2], 0
    %73 = sst [smem:[%s72]] %s71
    // Predicated region
    $region22: #{tpu_custom_call.1} parent=1 // pred_check
      %p74 = pneg %p36
    $region23: #{tpu_custom_call.1} parent=1 // pred_check_branch
      %76 = sbr.rel (%p74) target = $region25
    $region24: #{tpu_custom_call.1} parent=1 // pred_region
      %s77 = sld [smem:[#allocation2]]
      %v78 = vrcp.pop 8.0
      %s79 = vtos %v78
      %s80 = smul.f32 %s77, %s79
      %s81 = scalar_lea.smem [#allocation8], 0
      %82 = sst [smem:[%s81]] %s80
    $region25: #{tpu_custom_call.1} parent=1 // pred_fallthru
      _
    // Predicated region
    $region26: #{tpu_custom_call.1} parent=1 // pred_check
      _
    $region27: #{tpu_custom_call.1} parent=1 // pred_check_branch
      %84 = sbr.rel (0) target = $region29
    $region28: #{tpu_custom_call.1} parent=1 // pred_region
      %s86 = ssub.s32 16, 16
      %87 = vsyncadd [#allocation5], %s86
      %90 = dma.smem_to_hbm [#allocation8], 16, %s2, [#allocation5]
    $region29: #{tpu_custom_call.1} parent=1 // pred_fallthru
      _
    // Predicated region
    $region30: #{tpu_custom_call.1} parent=1 // pred_check
      _
    $region31: #{tpu_custom_call.1} parent=1 // pred_check_branch
      %92 = sbr.rel (0) target = $region33
    $region32: #{tpu_custom_call.1} parent=1 // pred_region
      %93 = dma.done [#allocation5], 16
    $region33: #{tpu_custom_call.1} parent=1 // pred_fallthru
      _
    %94 = sfence
    %95 = vsyncpa [#allocation4], 1
    %96 = vsyncpa [#allocation7], 1
    %97 = vsyncpa [#allocation5], 1

</llo_original>
